<compile_context>
chip_gen: v6e
topology: v6e:2x2x1
jax: 0.10.0
libtpu: 0.0.40
codegen_flags: <defaults>
</compile_context>

<pallas_src>
import jax
import jax.numpy as jnp
from jax import lax
from jax.experimental import pallas as pl
from jax.experimental.pallas import tpu as pltpu


# --------------------------------------------------------------------------- #
# Kernels
# --------------------------------------------------------------------------- #
def _highway_fused_kernel(x_ref, w_ref, b_ref, o_ref):
    """All layers in one invocation: full [L, S, 3S] bf16 weight slab resident in VMEM.

    Grid (if any) is over batch tiles; weights/biases use a constant index map so
    they are not re-fetched per batch tile.
    """
    num_layers = w_ref.shape[0]
    size = o_ref.shape[-1]

    def layer_step(layer, h):
        w = w_ref[layer]                                   # [S, 3S] bf16 — no f32 upcast
        b = b_ref[layer]                                   # [1, 3S] f32
        # Native bf16 MXU operands, f32 accumulation; carry h stays f32.
        y = jnp.dot(h.astype(w.dtype), w,
                    preferred_element_type=jnp.float32) + b
        gate = jax.nn.sigmoid(y[:, :size])
        nonlinear = jnp.maximum(y[:, size:2 * size], 0.0)  # f = ReLU
        linear = y[:, 2 * size:]
        return linear + gate * (nonlinear - linear)

    h = x_ref[...].astype(jnp.float32)                     # [Btile, S] f32 carry
    if num_layers <= 4:
        for layer in range(num_layers):                    # static unroll (small L)
            h = layer_step(layer, h)
    else:
        # Bounded live ranges / codegen size for larger layer counts.
        h = lax.fori_loop(0, num_layers, layer_step, h)
    o_ref[...] = h.astype(o_ref.dtype)


def _highway_layer_kernel(x_ref, w_ref, b_ref, o_ref, h_ref):
    """One grid step == one layer; f32 carry lives in VMEM scratch h_ref."""
    size = o_ref.shape[-1]
    layer = pl.program_id(0)

    @pl.when(layer == 0)
    def _():
        h_ref[...] = x_ref[...].astype(jnp.float32)

    h = h_ref[...]                                          # [B, S] f32
    w = w_ref[0]                                            # [S, 3S] bf16 — no f32 upcast
    b = b_ref[0]                                            # [1, 3S] f32
    y = jnp.dot(h.astype(w.dtype), w,
                preferred_element_type=jnp.float32) + b     # [B, 3S]
    gate = jax.nn.sigmoid(y[:, :size])
    nonlinear = jnp.maximum(y[:, size:2 * size], 0.0)       # f = ReLU
    linear = y[:, 2 * size:]
    h_ref[...] = linear + gate * (nonlinear - linear)

    @pl.when(layer == pl.num_programs(0) - 1)
    def _():
        o_ref[...] = h_ref[...].astype(o_ref.dtype)


# --------------------------------------------------------------------------- #
# Generation-aware VMEM budgeting
# --------------------------------------------------------------------------- #
_DEFAULT_VMEM_CAPACITY = 64 * 1024 * 1024   # conservative fallback (v7x per-TC)


def _vmem_capacity_bytes():
    try:
        cap = int(pltpu.get_tpu_info().vmem_capacity_bytes)
        if cap > 0:
            return cap
    except Exception:
        pass
    return _DEFAULT_VMEM_CAPACITY


def _clamp_vmem_limit(requested_bytes, capacity):
    """Leave 8 MiB headroom below physical capacity; never go below 32 MiB (if possible)."""
    ceiling = max(capacity - (8 << 20), 16 << 20)
    floor = min(32 << 20, ceiling)
    return int(min(max(requested_bytes, floor), ceiling))


# --------------------------------------------------------------------------- #
# Wrappers
# --------------------------------------------------------------------------- #
def highway_forward_fused(x, w_cat, b_cat, *, batch_tile=None):
    """Collapsed layer grid: whole bf16 weight slab VMEM-resident, grid over batch tiles."""
    batch, size = x.shape
    num_layers = w_cat.shape[0]
    assert size % 128 == 0, "size must be a multiple of 128 for lane-aligned role slices"

    if batch_tile is None:
        batch_tile = min(batch, 256)
    if batch % batch_tile != 0 or (batch_tile % 8 != 0 and batch_tile != batch):
        batch_tile = batch                                  # fall back to a single tile
    grid = (batch // batch_tile,)

    capacity = _vmem_capacity_bytes()
    weight_bytes = w_cat.size * w_cat.dtype.itemsize
    bias_bytes = b_cat.size * b_cat.dtype.itemsize
    act_bytes = batch_tile * size * 4 * 2 * 2               # x + out, double-buffered, f32
    y_bytes = batch_tile * 3 * size * 4
    vmem_limit = _clamp_vmem_limit(
        weight_bytes + bias_bytes + act_bytes + y_bytes + (8 << 20), capacity)

    return pl.pallas_call(
        _highway_fused_kernel,
        out_shape=jax.ShapeDtypeStruct((batch, size), x.dtype),
        grid_spec=pltpu.PrefetchScalarGridSpec(
            num_scalar_prefetch=0,
            grid=grid,
            in_specs=[
                pl.BlockSpec((batch_tile, size), lambda i: (i, 0)),            # x tile
                pl.BlockSpec((num_layers, size, 3 * size), lambda i: (0, 0, 0)),  # resident W
                pl.BlockSpec((num_layers, 1, 3 * size), lambda i: (0, 0, 0)),     # resident b
            ],
            out_specs=pl.BlockSpec((batch_tile, size), lambda i: (i, 0)),
        ),
        compiler_params=pltpu.CompilerParams(
            dimension_semantics=("parallel",),               # batch tiles independent
            vmem_limit_bytes=vmem_limit,
        ),
    )(x, w_cat, b_cat)


def highway_forward_pipelined(x, w_cat, b_cat):
    """Grid-over-layers form: streams one fused [S, 3S] bf16 weight slab per step."""
    batch, size = x.shape
    num_layers = w_cat.shape[0]
    assert size % 128 == 0, "size must be a multiple of 128 for lane-aligned role slices"

    capacity = _vmem_capacity_bytes()
    slab_bytes = size * 3 * size * w_cat.dtype.itemsize      # one layer's fused weights
    carry_bytes = batch * size * 4
    y_bytes = batch * 3 * size * 4
    vmem_limit = _clamp_vmem_limit(
        2 * slab_bytes + carry_bytes + y_bytes + (8 << 20), capacity)

    return pl.pallas_call(
        _highway_layer_kernel,
        out_shape=jax.ShapeDtypeStruct((batch, size), x.dtype),
        grid_spec=pltpu.PrefetchScalarGridSpec(
            num_scalar_prefetch=0,
            grid=(num_layers,),
            in_specs=[
                pl.BlockSpec((batch, size), lambda l: (0, 0)),            # x (read once)
                pl.BlockSpec((1, size, 3 * size), lambda l: (l, 0, 0)),   # fused weights
                pl.BlockSpec((1, 1, 3 * size), lambda l: (l, 0, 0)),      # fused biases
            ],
            out_specs=pl.BlockSpec((batch, size), lambda l: (0, 0)),
            scratch_shapes=[pltpu.VMEM((batch, size), jnp.float32)],      # f32 carry
        ),
        compiler_params=pltpu.CompilerParams(
            dimension_semantics=("arbitrary",),   # layer axis is a sequential carry
            vmem_limit_bytes=vmem_limit,
        ),
    )(x, w_cat, b_cat)


def highway_forward(x, w_cat, b_cat):
    """Dispatch: collapse the layer grid when the whole bf16 weight slab fits a
    generation-aware VMEM budget (~1/4 of physical VMEM: ~16 MiB on v7x,
    ~32 MiB on v5e/v6e); otherwise stream one layer per grid step."""
    capacity = _vmem_capacity_bytes()
    weight_budget = capacity // 4
    weight_bytes = w_cat.size * w_cat.dtype.itemsize
    if weight_bytes <= weight_budget:
        return highway_forward_fused(x, w_cat, b_cat)
    return highway_forward_pipelined(x, w_cat, b_cat)


# --------------------------------------------------------------------------- #
# Parameter construction (weight_norm folded, fused layout) + reference
# --------------------------------------------------------------------------- #
def _weight_norm(v, g):
    """PyTorch weight_norm default (dim=0 for Linear): W = g * v / ||v|| per output row."""
    norm = jnp.sqrt(jnp.sum(v * v, axis=1, keepdims=True))    # [out, 1]
    return v * (g[:, None] / norm)


def make_params(key, size, num_layers, weight_dtype=jnp.bfloat16):
    """Synthetic gate/nonlinear/linear weight_norm stacks, folded and fused.

    Returns:
      w_cat: [L, S, 3S] (pre-transposed, [gate | nonlinear | linear] on output axis)
      b_cat: [L, 1, 3S] (f32 biases in matching order)
    """
    assert size % 128 == 0, "size must be a multiple of 128 (pad if necessary)"
    keys = jax.random.split(key, num_layers * 3 * 3)
    ki = iter(keys)
    w_layers, b_layers = [], []
    for _ in range(num_layers):
        role_w, role_b = [], []
        for _role in range(3):                      # gate, nonlinear, linear
            v = jax.random.normal(next(ki), (size, size), jnp.float32) / jnp.sqrt(size)
            g = 1.0 + 0.1 * jax.random.normal(next(ki), (size,), jnp.float32)
            b = 0.1 * jax.random.normal(next(ki), (size,), jnp.float32)
            w_eff = _weight_norm(v, g)              # [out, in]
            role_w.append(w_eff.T)                  # pre-transpose -> [in, out]
            role_b.append(b)
        w_layers.append(jnp.concatenate(role_w, axis=1))        # [S, 3S]
        b_layers.append(jnp.concatenate(role_b)[None, :])       # [1, 3S]
    w_cat = jnp.stack(w_layers).astype(weight_dtype)            # [L, S, 3S]
    b_cat = jnp.stack(b_layers)                                 # [L, 1, 3S] f32
    return w_cat, b_cat


def highway_reference(x, w_cat, b_cat):
    """Pure-JAX reference on the same fused (bf16-valued) parameters."""
    size = x.shape[1]
    h = x.astype(jnp.float32)
    for l in range(w_cat.shape[0]):
        y = h @ w_cat[l].astype(jnp.float32) + b_cat[l].astype(jnp.float32)
        gate = jax.nn.sigmoid(y[:, :size])
        nonlinear = jnp.maximum(y[:, size:2 * size], 0.0)
        linear = y[:, 2 * size:]
        h = gate * nonlinear + (1.0 - gate) * linear   # original combine form
    return h.astype(x.dtype)


# --------------------------------------------------------------------------- #
if __name__ == "__main__":
    batch, size, num_layers = 8, 128, 3

    key = jax.random.PRNGKey(0)
    kx, kp = jax.random.split(key)
    x = jax.random.normal(kx, (batch, size), jnp.float32)
    w_cat, b_cat = make_params(kp, size, num_layers)

    ref = highway_reference(x, w_cat, b_cat)

    out_fused = jax.block_until_ready(jax.jit(highway_forward)(x, w_cat, b_cat))
    out_grid = jax.block_until_ready(jax.jit(highway_forward_pipelined)(x, w_cat, b_cat))

    assert out_fused.shape == (batch, size)
    assert out_grid.shape == (batch, size)
    # Tolerance accounts for the bf16 MXU operand path (carry rounded to bf16 per
    # layer) vs the f32 XLA reference; any structural bug would be O(1) off.
    assert jnp.allclose(out_fused, ref, atol=3e-2, rtol=3e-2), (
        float(jnp.max(jnp.abs(out_fused - ref))))
    assert jnp.allclose(out_grid, ref, atol=3e-2, rtol=3e-2), (
        float(jnp.max(jnp.abs(out_grid - ref))))

    print("KERNEL_OK")
</pallas_src>

<mosaic_0001>
module attributes {stable_mosaic.version = 11 : i64} {
  func.func @_highway_fused_kernel(%arg0: i32, %arg1: memref<8x128xf32, #tpu.memory_space<vmem>>, %arg2: memref<3x128x384xbf16, #tpu.memory_space<vmem>>, %arg3: memref<3x1x384xf32, #tpu.memory_space<vmem>>, %arg4: memref<8x128xf32, #tpu.memory_space<vmem>>) attributes {dimension_semantics = [#tpu.dimension_semantics<parallel>], iteration_bounds = array<i64: 1>, scalar_prefetch = 0 : i64, scratch_operands = 0 : i64, tpu.core_type = #tpu.core_type<tc>, window_params = [{transform_indices = @transform_0, window_bounds = array<i64: 8, 128>}, {pipeline_mode = #tpu.pipeline_mode<synchronous>, transform_indices = @transform_1, window_bounds = array<i64: 3, 128, 384>}, {pipeline_mode = #tpu.pipeline_mode<synchronous>, transform_indices = @transform_2, window_bounds = array<i64: 3, 1, 384>}, {transform_indices = @transform_3, window_bounds = array<i64: 8, 128>}]} {
    %c0 = arith.constant 0 : index
    %c0_0 = arith.constant 0 : index
    %0 = vector.load %arg1[%c0, %c0_0] : memref<8x128xf32, #tpu.memory_space<vmem>>, vector<8x128xf32>
    %c0_1 = arith.constant 0 : index
    %c0_2 = arith.constant 0 : index
    %c0_3 = arith.constant 0 : index
    %1 = vector.load %arg2[%c0_1, %c0_2, %c0_3] : memref<3x128x384xbf16, #tpu.memory_space<vmem>>, vector<1x128x384xbf16>
    %2 = vector.shape_cast %1 : vector<1x128x384xbf16> to vector<128x384xbf16>
    %c0_4 = arith.constant 0 : index
    %c0_5 = arith.constant 0 : index
    %c0_6 = arith.constant 0 : index
    %3 = vector.load %arg3[%c0_4, %c0_5, %c0_6] : memref<3x1x384xf32, #tpu.memory_space<vmem>>, vector<1x1x384xf32>
    %4 = vector.shape_cast %3 : vector<1x1x384xf32> to vector<1x384xf32>
    %5 = arith.truncf %0 : vector<8x128xf32> to vector<8x128xbf16>
    %cst = arith.constant dense<0.000000e+00> : vector<8x384xf32>
    %6 = tpu.matmul %5, %2, %cst {dimension_numbers = #tpu.dot_dimension_numbers<[1], [0], [0], [1], [0, 0, 1, 1], [], []>} : vector<8x128xbf16>, vector<128x384xbf16>, vector<8x384xf32> -> vector<8x384xf32>
    %7 = vector.broadcast %4 : vector<1x384xf32> to vector<8x384xf32>
    %8 = arith.addf %6, %7 : vector<8x384xf32>
    %9 = vector.extract_strided_slice %8 {offsets = [0, 0], sizes = [8, 128], strides = [1, 1]} : vector<8x384xf32> to vector<8x128xf32>
    %10 = arith.negf %9 : vector<8x128xf32>
    %11 = math.exp %10 : vector<8x128xf32>
    %cst_7 = arith.constant 1.000000e+00 : f32
    %12 = vector.broadcast %cst_7 : f32 to vector<8x128xf32>
    %13 = arith.addf %12, %11 : vector<8x128xf32>
    %14 = arith.divf %12, %13 : vector<8x128xf32>
    %15 = vector.extract_strided_slice %8 {offsets = [0, 128], sizes = [8, 128], strides = [1, 1]} : vector<8x384xf32> to vector<8x128xf32>
    %cst_8 = arith.constant 0.000000e+00 : f32
    %16 = vector.broadcast %cst_8 : f32 to vector<8x128xf32>
    %17 = arith.maximumf %15, %16 : vector<8x128xf32>
    %18 = vector.extract_strided_slice %8 {offsets = [0, 256], sizes = [8, 128], strides = [1, 1]} : vector<8x384xf32> to vector<8x128xf32>
    %19 = arith.subf %17, %18 : vector<8x128xf32>
    %20 = arith.mulf %14, %19 : vector<8x128xf32>
    %21 = arith.addf %18, %20 : vector<8x128xf32>
    %c1 = arith.constant 1 : index
    %c0_9 = arith.constant 0 : index
    %c0_10 = arith.constant 0 : index
    %22 = vector.load %arg2[%c1, %c0_9, %c0_10] : memref<3x128x384xbf16, #tpu.memory_space<vmem>>, vector<1x128x384xbf16>
    %23 = vector.shape_cast %22 : vector<1x128x384xbf16> to vector<128x384xbf16>
    %c1_11 = arith.constant 1 : index
    %c0_12 = arith.constant 0 : index
    %c0_13 = arith.constant 0 : index
    %24 = vector.load %arg3[%c1_11, %c0_12, %c0_13] : memref<3x1x384xf32, #tpu.memory_space<vmem>>, vector<1x1x384xf32>
    %25 = vector.shape_cast %24 : vector<1x1x384xf32> to vector<1x384xf32>
    %26 = arith.truncf %21 : vector<8x128xf32> to vector<8x128xbf16>
    %cst_14 = arith.constant dense<0.000000e+00> : vector<8x384xf32>
    %27 = tpu.matmul %26, %23, %cst_14 {dimension_numbers = #tpu.dot_dimension_numbers<[1], [0], [0], [1], [0, 0, 1, 1], [], []>} : vector<8x128xbf16>, vector<128x384xbf16>, vector<8x384xf32> -> vector<8x384xf32>
    %28 = vector.broadcast %25 : vector<1x384xf32> to vector<8x384xf32>
    %29 = arith.addf %27, %28 : vector<8x384xf32>
    %30 = vector.extract_strided_slice %29 {offsets = [0, 0], sizes = [8, 128], strides = [1, 1]} : vector<8x384xf32> to vector<8x128xf32>
    %31 = arith.negf %30 : vector<8x128xf32>
    %32 = math.exp %31 : vector<8x128xf32>
    %cst_15 = arith.constant 1.000000e+00 : f32
    %33 = vector.broadcast %cst_15 : f32 to vector<8x128xf32>
    %34 = arith.addf %33, %32 : vector<8x128xf32>
    %35 = arith.divf %33, %34 : vector<8x128xf32>
    %36 = vector.extract_strided_slice %29 {offsets = [0, 128], sizes = [8, 128], strides = [1, 1]} : vector<8x384xf32> to vector<8x128xf32>
    %cst_16 = arith.constant 0.000000e+00 : f32
    %37 = vector.broadcast %cst_16 : f32 to vector<8x128xf32>
    %38 = arith.maximumf %36, %37 : vector<8x128xf32>
    %39 = vector.extract_strided_slice %29 {offsets = [0, 256], sizes = [8, 128], strides = [1, 1]} : vector<8x384xf32> to vector<8x128xf32>
    %40 = arith.subf %38, %39 : vector<8x128xf32>
    %41 = arith.mulf %35, %40 : vector<8x128xf32>
    %42 = arith.addf %39, %41 : vector<8x128xf32>
    %c2 = arith.constant 2 : index
    %c0_17 = arith.constant 0 : index
    %c0_18 = arith.constant 0 : index
    %43 = vector.load %arg2[%c2, %c0_17, %c0_18] : memref<3x128x384xbf16, #tpu.memory_space<vmem>>, vector<1x128x384xbf16>
    %44 = vector.shape_cast %43 : vector<1x128x384xbf16> to vector<128x384xbf16>
    %c2_19 = arith.constant 2 : index
    %c0_20 = arith.constant 0 : index
    %c0_21 = arith.constant 0 : index
    %45 = vector.load %arg3[%c2_19, %c0_20, %c0_21] : memref<3x1x384xf32, #tpu.memory_space<vmem>>, vector<1x1x384xf32>
    %46 = vector.shape_cast %45 : vector<1x1x384xf32> to vector<1x384xf32>
    %47 = arith.truncf %42 : vector<8x128xf32> to vector<8x128xbf16>
    %cst_22 = arith.constant dense<0.000000e+00> : vector<8x384xf32>
    %48 = tpu.matmul %47, %44, %cst_22 {dimension_numbers = #tpu.dot_dimension_numbers<[1], [0], [0], [1], [0, 0, 1, 1], [], []>} : vector<8x128xbf16>, vector<128x384xbf16>, vector<8x384xf32> -> vector<8x384xf32>
    %49 = vector.broadcast %46 : vector<1x384xf32> to vector<8x384xf32>
    %50 = arith.addf %48, %49 : vector<8x384xf32>
    %51 = vector.extract_strided_slice %50 {offsets = [0, 0], sizes = [8, 128], strides = [1, 1]} : vector<8x384xf32> to vector<8x128xf32>
    %52 = arith.negf %51 : vector<8x128xf32>
    %53 = math.exp %52 : vector<8x128xf32>
    %cst_23 = arith.constant 1.000000e+00 : f32
    %54 = vector.broadcast %cst_23 : f32 to vector<8x128xf32>
    %55 = arith.addf %54, %53 : vector<8x128xf32>
    %56 = arith.divf %54, %55 : vector<8x128xf32>
    %57 = vector.extract_strided_slice %50 {offsets = [0, 128], sizes = [8, 128], strides = [1, 1]} : vector<8x384xf32> to vector<8x128xf32>
    %cst_24 = arith.constant 0.000000e+00 : f32
    %58 = vector.broadcast %cst_24 : f32 to vector<8x128xf32>
    %59 = arith.maximumf %57, %58 : vector<8x128xf32>
    %60 = vector.extract_strided_slice %50 {offsets = [0, 256], sizes = [8, 128], strides = [1, 1]} : vector<8x384xf32> to vector<8x128xf32>
    %61 = arith.subf %59, %60 : vector<8x128xf32>
    %62 = arith.mulf %56, %61 : vector<8x128xf32>
    %63 = arith.addf %60, %62 : vector<8x128xf32>
    %c0_25 = arith.constant 0 : index
    %c0_26 = arith.constant 0 : index
    %64 = vector.load %arg4[%c0_25, %c0_26] : memref<8x128xf32, #tpu.memory_space<vmem>>, vector<8x128xf32>
    tpu.vector_store %arg4[%c0_25, %c0_26], %63 {strides = array<i32>} : memref<8x128xf32, #tpu.memory_space<vmem>>, vector<8x128xf32>,
    return
  }
  func.func @transform_0(%arg0: i32) -> (i32, i32) {
    %c0_i32 = arith.constant 0 : i32
    %c0_i32_0 = arith.constant 0 : i32
    return %arg0, %c0_i32 : i32, i32
  }
  func.func @transform_1(%arg0: i32) -> (i32, i32, i32) {
    %c0_i32 = arith.constant 0 : i32
    %c0_i32_0 = arith.constant 0 : i32
    %c0_i32_1 = arith.constant 0 : i32
    %c0_i32_2 = arith.constant 0 : i32
    return %c0_i32, %c0_i32_0, %c0_i32_1 : i32, i32, i32
  }
  func.func @transform_2(%arg0: i32) -> (i32, i32, i32) {
    %c0_i32 = arith.constant 0 : i32
    %c0_i32_0 = arith.constant 0 : i32
    %c0_i32_1 = arith.constant 0 : i32
    %c0_i32_2 = arith.constant 0 : i32
    return %c0_i32, %c0_i32_0, %c0_i32_1 : i32, i32, i32
  }
  func.func @transform_3(%arg0: i32) -> (i32, i32) {
    %c0_i32 = arith.constant 0 : i32
    %c0_i32_0 = arith.constant 0 : i32
    return %arg0, %c0_i32 : i32, i32
  }
}

</mosaic_0001>

<llo_original>
// kernel: highway_forward.1
$region0: #{highway_forward.1}
  #allocation0 [shape = 'u32[]', space=smem, size = 0x4, offset = 0x4, fixed_abs, tag = 'smem constant byte address 0x4 - core index']
  #allocation1 [shape = 'u32[144,128]{1,0:T(1,128)}', space=vmem, size = 0x12000, scoped, tag = 'internal scratch']
  %s0 = inlined_call_operand.hbm [shape: f32[8,128], index: 0, kind: input, shape index: {}]
  %s1 = inlined_call_operand.hbm [shape: bf16[3,128,384], index: 1, kind: input, shape index: {}]
  %s2 = inlined_call_operand.hbm [shape: f32[3,1,384], index: 2, kind: input, shape index: {}]
  %s3 = inlined_call_operand.hbm [shape: f32[8,128], index: 3, kind: output, shape index: {}]
  %s4 = sld [smem:[#allocation0]]
  $region34: #{highway_forward.1} parent=0
    _
  %s6 = ssub.s32 1, %s4
  %s7 = scalar_select 0, %s6, %s4
  $region1: #{highway_forward.1} parent=0
    #allocation2 [shape = 'u8[4096]{0}', space=vmem, size = 0x1000, scoped, tag = 'input window, operand 0, single buffered']
    #allocation3 [shape = 's32[1]{0}', space=sflag, size = 0x4, scoped, tag = 'scoped memory for highway_forward.1']
    #allocation4 [shape = 's32[1]{0}', space=sflag, size = 0x4, scoped, tag = 'scoped memory for highway_forward.1']
    #allocation5 [shape = 'u8[294912]{0}', space=vmem, size = 0x48000, scoped, tag = 'input window, operand 1, single buffered']
    #allocation6 [shape = 's32[1]{0}', space=sflag, size = 0x4, scoped, tag = 'scoped memory for highway_forward.1']
    #allocation7 [shape = 'u8[4608]{0}', space=vmem, size = 0x1400, scoped, tag = 'input window, operand 2, single buffered']
    #allocation8 [shape = 'u8[4096]{0}', space=vmem, size = 0x1000, scoped, tag = 'output window, operand 0, single buffered']
    %8 = vsyncpa [#allocation3], 0
    %9 = vsyncpa [#allocation6], 0
    %10 = vsyncpa [#allocation4], 0
    // Predicated region
    $region2: #{highway_forward.1} parent=1 // pred_check
      _
    $region3: #{highway_forward.1} parent=1 // pred_check_branch
      %12 = sbr.rel (0) target = $region5
    $region4: #{highway_forward.1} parent=1 // pred_region
      %s14 = ssub.s32 128, 128
      %15 = vsyncadd [#allocation3], %s14
      %s17 = sshll.u32 [#allocation2], 4
      %s18 = int_to_ptr.vmem [resolvable:$true] %s17
      %20 = dma.hbm_to_vmem [thread:$0]  %s0, 128, %s18, [#allocation3]
    $region5: #{highway_forward.1} parent=1 // pred_fallthru
      _
    // Predicated region
    $region6: #{highway_forward.1} parent=1 // pred_check
      _
    $region7: #{highway_forward.1} parent=1 // pred_check_branch
      %22 = sbr.rel (0) target = $region9
    $region8: #{highway_forward.1} parent=1 // pred_region
      %s24 = ssub.s32 9216, 9216
      %25 = vsyncadd [#allocation6], %s24
      %s26 = sshll.u32 [#allocation5], 4
      %s27 = int_to_ptr.vmem [resolvable:$true] %s26
      %32 = dma.hbm_to_vmem [thread:$0]  %s1, 9216, %s27, [#allocation6], 192, 192, 12
    $region9: #{highway_forward.1} parent=1 // pred_fallthru
      _
    // Predicated region
    $region10: #{highway_forward.1} parent=1 // pred_check
      _
    $region11: #{highway_forward.1} parent=1 // pred_check_branch
      %34 = sbr.rel (0) target = $region13
    $region12: #{highway_forward.1} parent=1 // pred_region
      %s36 = ssub.s32 144, 144
      %37 = vsyncadd [#allocation6], %s36
      %s38 = sshll.u32 [#allocation7], 4
      %s39 = int_to_ptr.vmem [resolvable:$true] %s38
      %44 = dma.hbm_to_vmem [thread:$0]  %s2, 144, %s39, [#allocation6], 48, 48, 3
    $region13: #{highway_forward.1} parent=1 // pred_fallthru
      _
    // Predicated region
    $region14: #{highway_forward.1} parent=1 // pred_check
      _
    $region15: #{highway_forward.1} parent=1 // pred_check_branch
      %46 = sbr.rel (0) target = $region17
    $region16: #{highway_forward.1} parent=1 // pred_region
      %47 = dma.done [#allocation3], 128
    $region17: #{highway_forward.1} parent=1 // pred_fallthru
      _
    // Predicated region
    $region18: #{highway_forward.1} parent=1 // pred_check
      _
    $region19: #{highway_forward.1} parent=1 // pred_check_branch
      %49 = sbr.rel (0) target = $region21
    $region20: #{highway_forward.1} parent=1 // pred_region
      %50 = dma.done [#allocation6], 9216
    $region21: #{highway_forward.1} parent=1 // pred_fallthru
      _
    // Predicated region
    $region22: #{highway_forward.1} parent=1 // pred_check
      _
    $region23: #{highway_forward.1} parent=1 // pred_check_branch
      %52 = sbr.rel (0) target = $region25
    $region24: #{highway_forward.1} parent=1 // pred_region
      %53 = dma.done [#allocation6], 144
    $region25: #{highway_forward.1} parent=1 // pred_fallthru
      _
    %v55 = vld [vmem:[#allocation2] sm:$0xff]
    %v56 = vld [vmem:[#allocation5] sm:$0xff]
    %v57 = vld [vmem:[#allocation5 + $0x8] sm:$0xf]
    %v58 = vld [vmem:[#allocation5 + $0xc] sm:$0xff]
    %v59 = vld [vmem:[#allocation5 + $0x14] sm:$0xf]
    %v60 = vld [vmem:[#allocation5 + $0x18] sm:$0xff]
    %v61 = vld [vmem:[#allocation5 + $0x20] sm:$0xf]
    %v62 = vld [vmem:[#allocation5 + $0x24] sm:$0xff]
    %v63 = vld [vmem:[#allocation5 + $0x2c] sm:$0xf]
    %v64 = vld [vmem:[#allocation5 + $0x30] sm:$0xff]
    %v65 = vld [vmem:[#allocation5 + $0x38] sm:$0xf]
    %v66 = vld [vmem:[#allocation5 + $0x3c] sm:$0xff]
    %v67 = vld [vmem:[#allocation5 + $0x44] sm:$0xf]
    %v68 = vld [vmem:[#allocation5 + $0x48] sm:$0xff]
    %v69 = vld [vmem:[#allocation5 + $0x50] sm:$0xf]
    %v70 = vld [vmem:[#allocation5 + $0x54] sm:$0xff]
    %v71 = vld [vmem:[#allocation5 + $0x5c] sm:$0xf]
    %v72 = vld [vmem:[#allocation5 + $0x60] sm:$0xff]
    %v73 = vld [vmem:[#allocation5 + $0x68] sm:$0xf]
    %v74 = vld [vmem:[#allocation5 + $0x6c] sm:$0xff]
    %v75 = vld [vmem:[#allocation5 + $0x74] sm:$0xf]
    %v76 = vld [vmem:[#allocation5 + $0x78] sm:$0xff]
    %v77 = vld [vmem:[#allocation5 + $0x80] sm:$0xf]
    %v78 = vld [vmem:[#allocation5 + $0x84] sm:$0xff]
    %v79 = vld [vmem:[#allocation5 + $0x8c] sm:$0xf]
    %v80 = vld [vmem:[#allocation5 + $0x90] sm:$0xff]
    %v81 = vld [vmem:[#allocation5 + $0x98] sm:$0xf]
    %v82 = vld [vmem:[#allocation5 + $0x9c] sm:$0xff]
    %v83 = vld [vmem:[#allocation5 + $0xa4] sm:$0xf]
    %v84 = vld [vmem:[#allocation5 + $0xa8] sm:$0xff]
    %v85 = vld [vmem:[#allocation5 + $0xb0] sm:$0xf]
    %v86 = vld [vmem:[#allocation5 + $0xb4] sm:$0xff]
    %v87 = vld [vmem:[#allocation5 + $0xbc] sm:$0xf]
    %v88 = vld [vmem:[#allocation7] sm:$0x7]
    %v89 = vpack.c.bf16 %v55, %v55
    %v91 = vlaneseq
    %v92 = vshrl.u32 %v91, 7
    %v93 = vsub.s32 0, %v92
    %v94 = vrot.slane %v88, %v93
    %v95 = vlaneseq
    %v96 = vshrl.u32 %v95, 7
    %v97 = vsub.s32 1, %v96
    %v98 = vrot.slane %v88, %v97
    %v99 = vlaneseq
    %v100 = vshrl.u32 %v99, 7
    %v101 = vsub.s32 2, %v100
    %v102 = vrot.slane %v88, %v101
    %v138 = vunpack.c.l.b16 %v56
    %v139 = vunpack.c.h.b16 %v56
    %v140 = vunpack.c.l.b16 %v57
    %v141 = vunpack.c.l.b16 %v58
    %v142 = vunpack.c.h.b16 %v58
    %v143 = vunpack.c.l.b16 %v59
    %v144 = vunpack.c.l.b16 %v60
    %v145 = vunpack.c.h.b16 %v60
    %v146 = vunpack.c.l.b16 %v61
    %v147 = vunpack.c.l.b16 %v62
    %v148 = vunpack.c.h.b16 %v62
    %v149 = vunpack.c.l.b16 %v63
    %v150 = vunpack.c.l.b16 %v64
    %v151 = vunpack.c.h.b16 %v64
    %v152 = vunpack.c.l.b16 %v65
    %v153 = vunpack.c.l.b16 %v66
    %v154 = vunpack.c.h.b16 %v66
    %v155 = vunpack.c.l.b16 %v67
    %v156 = vunpack.c.l.b16 %v68
    %v157 = vunpack.c.h.b16 %v68
    %v158 = vunpack.c.l.b16 %v69
    %v159 = vunpack.c.l.b16 %v70
    %v160 = vunpack.c.h.b16 %v70
    %v161 = vunpack.c.l.b16 %v71
    %v162 = vunpack.c.l.b16 %v72
    %v163 = vunpack.c.h.b16 %v72
    %v164 = vunpack.c.l.b16 %v73
    %v165 = vunpack.c.l.b16 %v74
    %v166 = vunpack.c.h.b16 %v74
    %v167 = vunpack.c.l.b16 %v75
    %v168 = vunpack.c.l.b16 %v76
    %v169 = vunpack.c.h.b16 %v76
    %v170 = vunpack.c.l.b16 %v77
    %v171 = vunpack.c.l.b16 %v78
    %v172 = vunpack.c.h.b16 %v78
    %v173 = vunpack.c.l.b16 %v79
    %v174 = vunpack.c.l.b16 %v80
    %v175 = vunpack.c.h.b16 %v80
    %v176 = vunpack.c.l.b16 %v81
    %v177 = vunpack.c.l.b16 %v82
    %v178 = vunpack.c.h.b16 %v82
    %v179 = vunpack.c.l.b16 %v83
    %v180 = vunpack.c.l.b16 %v84
    %v181 = vunpack.c.h.b16 %v84
    %v182 = vunpack.c.l.b16 %v85
    %v183 = vunpack.c.l.b16 %v86
    %v184 = vunpack.c.h.b16 %v86
    %v185 = vunpack.c.l.b16 %v87
    %v186 = vpack.c.b16 %v141, %v138
    %v187 = vpack.c.b16 %v142, %v139
    %v188 = vpack.c.b16 %v143, %v140
    %v189 = vpack.c.b16 %v147, %v144
    %v190 = vpack.c.b16 %v148, %v145
    %v191 = vpack.c.b16 %v149, %v146
    %v192 = vpack.c.b16 %v153, %v150
    %v193 = vpack.c.b16 %v154, %v151
    %v194 = vpack.c.b16 %v155, %v152
    %v195 = vpack.c.b16 %v159, %v156
    %v196 = vpack.c.b16 %v160, %v157
    %v197 = vpack.c.b16 %v161, %v158
    %v198 = vpack.c.b16 %v165, %v162
    %v199 = vpack.c.b16 %v166, %v163
    %v200 = vpack.c.b16 %v167, %v164
    %v201 = vpack.c.b16 %v171, %v168
    %v202 = vpack.c.b16 %v172, %v169
    %v203 = vpack.c.b16 %v173, %v170
    %v204 = vpack.c.b16 %v177, %v174
    %v205 = vpack.c.b16 %v178, %v175
    %v206 = vpack.c.b16 %v179, %v176
    %v207 = vpack.c.b16 %v183, %v180
    %v208 = vpack.c.b16 %v184, %v181
    %v209 = vpack.c.b16 %v185, %v182
    %234 = vmatprep.subr.bf16.mxu0 %v208
    %235 = vmatpush1.bf16.msra.mxu0 %v207
    %236 = vmatprep.subr.bf16.mxu0 %v205
    %237 = vmatpush1.bf16.msra.mxu0 %v204
    %238 = vmatprep.subr.bf16.mxu0 %v202
    %239 = vmatpush1.bf16.msra.mxu0 %v201
    %240 = vmatprep.subr.bf16.mxu0 %v199
    %241 = vmatpush1.bf16.msra.mxu0 %v198
    %242 = vmatprep.subr.bf16.mxu0 %v196
    %243 = vmatpush1.bf16.msra.mxu0 %v195
    %244 = vmatprep.subr.bf16.mxu0 %v193
    %245 = vmatpush1.bf16.msra.mxu0 %v192
    %246 = vmatprep.subr.bf16.mxu0 %v190
    %247 = vmatpush1.bf16.msra.mxu0 %v189
    %248 = vmatprep.subr.bf16.mxu0 %v187
    %249 = vmatpush1.bf16.msra.mxu0 %v186
    %250 = vmatprep.subr.bf16.mxu0 0
    %251 = vmatpush2.bf16.msra.mxu0 0
    %252 = vmatprep.subr.bf16.mxu0 0
    %253 = vmatpush2.bf16.msra.mxu0 0
    %254 = vmatprep.subr.bf16.mxu0 0
    %255 = vmatpush2.bf16.msra.mxu0 0
    %256 = vmatprep.subr.bf16.mxu0 0
    %257 = vmatpush2.bf16.msra.mxu0 0
    %258 = vmatprep.subr.bf16.mxu0 0
    %259 = vmatpush2.bf16.msra.mxu0 0
    %260 = vmatprep.subr.bf16.mxu0 0
    %261 = vmatpush2.bf16.msra.mxu0 0
    %262 = vmatprep.subr.bf16.mxu0 0
    %263 = vmatpush2.bf16.msra.mxu0 0
    %264 = vmatprep.subr.bf16.mxu0 0
    %265 = vmatpush2.bf16.msra.mxu0 0
    %266 = vmatprep.mubr.bf16.mxu0 0
    %267 = vmatmul.mubr.bf16.gmra.mxu0 %v89
    %v268 = vpop.f32.mrf.mxu0
    %v269 = vadd.f32 %v94, %v268
    %v270 = vpop.f32.mrf.mxu0
    %v271 = vadd.f32 %v98, %v270
    %v272 = vpop.f32.mrf.mxu0
    %v273 = vpop.f32.mrf.mxu0
    %274 = vdwg.mxu0
    %275 = vmatprep.subr.bf16.mxu0 0
    %276 = vmatpush1.bf16.msra.mxu0 %v209
    %277 = vmatprep.subr.bf16.mxu0 0
    %278 = vmatpush1.bf16.msra.mxu0 %v206
    %279 = vmatprep.subr.bf16.mxu0 0
    %280 = vmatpush1.bf16.msra.mxu0 %v203
    %281 = vmatprep.subr.bf16.mxu0 0
    %282 = vmatpush1.bf16.msra.mxu0 %v200
    %283 = vmatprep.subr.bf16.mxu0 0
    %284 = vmatpush1.bf16.msra.mxu0 %v197
    %285 = vmatprep.subr.bf16.mxu0 0
    %286 = vmatpush1.bf16.msra.mxu0 %v194
    %287 = vmatprep.subr.bf16.mxu0 0
    %288 = vmatpush1.bf16.msra.mxu0 %v191
    %289 = vmatprep.subr.bf16.mxu0 0
    %290 = vmatpush1.bf16.msra.mxu0 %v188
    %291 = vmatprep.subr.bf16.mxu0 0
    %292 = vmatpush2.bf16.msra.mxu0 0
    %293 = vmatprep.subr.bf16.mxu0 0
    %294 = vmatpush2.bf16.msra.mxu0 0
    %295 = vmatprep.subr.bf16.mxu0 0
    %296 = vmatpush2.bf16.msra.mxu0 0
    %297 = vmatprep.subr.bf16.mxu0 0
    %298 = vmatpush2.bf16.msra.mxu0 0
    %299 = vmatprep.subr.bf16.mxu0 0
    %300 = vmatpush2.bf16.msra.mxu0 0
    %301 = vmatprep.subr.bf16.mxu0 0
    %302 = vmatpush2.bf16.msra.mxu0 0
    %303 = vmatprep.subr.bf16.mxu0 0
    %304 = vmatpush2.bf16.msra.mxu0 0
    %305 = vmatprep.subr.bf16.mxu0 0
    %306 = vmatpush2.bf16.msra.mxu0 0
    %307 = vmatprep.mubr.bf16.mxu0 0
    %308 = vmatmul.mubr.bf16.gmra.mxu0 %v89
    %v309 = vpop.f32.mrf.mxu0
    %v310 = vadd.f32 %v102, %v309
    %v311 = vpop.f32.mrf.mxu0
    %v312 = vpop.f32.mrf.mxu0
    %v313 = vpop.f32.mrf.mxu0
    %314 = vdwg.mxu0
    %v315 = vxor.u32 %v269, 2147483648
    %v316 = vmul.f32 %v315, 1.442695
    %v317 = vpow.pop %v316
    %v318 = vadd.f32 %v317, 1.0
    %v319 = vrcp.pop %v318
    %v320 = vmul.f32 1.0, %v319
    %v321 = vmax.f32 %v271, 0.0
    %v322 = vsub.f32 %v321, %v310
    %v323 = vmul.f32 %v320, %v322
    %v324 = vadd.f32 %v310, %v323
    %s325 = scalar_lea.vmem [#allocation5], 192
    %v326 = vld [vmem:[%s325] sm:$0xff]
    %v327 = vld [vmem:[%s325 + $0x8] sm:$0xf]
    %v328 = vld [vmem:[%s325 + $0xc] sm:$0xff]
    %v329 = vld [vmem:[%s325 + $0x14] sm:$0xf]
    %v330 = vld [vmem:[%s325 + $0x18] sm:$0xff]
    %v331 = vld [vmem:[%s325 + $0x20] sm:$0xf]
    %v332 = vld [vmem:[%s325 + $0x24] sm:$0xff]
    %v333 = vld [vmem:[%s325 + $0x2c] sm:$0xf]
    %v334 = vld [vmem:[%s325 + $0x30] sm:$0xff]
    %v335 = vld [vmem:[%s325 + $0x38] sm:$0xf]
    %v336 = vld [vmem:[%s325 + $0x3c] sm:$0xff]
    %v337 = vld [vmem:[%s325 + $0x44] sm:$0xf]
    %v338 = vld [vmem:[%s325 + $0x48] sm:$0xff]
    %v339 = vld [vmem:[%s325 + $0x50] sm:$0xf]
    %v340 = vld [vmem:[%s325 + $0x54] sm:$0xff]
    %v341 = vld [vmem:[%s325 + $0x5c] sm:$0xf]
    %v342 = vld [vmem:[%s325 + $0x60] sm:$0xff]
    %v343 = vld [vmem:[%s325 + $0x68] sm:$0xf]
    %v344 = vld [vmem:[%s325 + $0x6c] sm:$0xff]
    %v345 = vld [vmem:[%s325 + $0x74] sm:$0xf]
    %v346 = vld [vmem:[%s325 + $0x78] sm:$0xff]
    %v347 = vld [vmem:[%s325 + $0x80] sm:$0xf]
    %v348 = vld [vmem:[%s325 + $0x84] sm:$0xff]
    %v349 = vld [vmem:[%s325 + $0x8c] sm:$0xf]
    %v350 = vld [vmem:[%s325 + $0x90] sm:$0xff]
    %v351 = vld [vmem:[%s325 + $0x98] sm:$0xf]
    %v352 = vld [vmem:[%s325 + $0x9c] sm:$0xff]
    %v353 = vld [vmem:[%s325 + $0xa4] sm:$0xf]
    %v354 = vld [vmem:[%s325 + $0xa8] sm:$0xff]
    %v355 = vld [vmem:[%s325 + $0xb0] sm:$0xf]
    %v356 = vld [vmem:[%s325 + $0xb4] sm:$0xff]
    %v357 = vld [vmem:[%s325 + $0xbc] sm:$0xf]
    %s358 = scalar_lea.vmem [#allocation7], 3
    %v359 = vld [vmem:[%s358] sm:$0x7]
    %v360 = vpack.c.bf16 %v324, %v324
    %v362 = vlaneseq
    %v363 = vshrl.u32 %v362, 7
    %v364 = vsub.s32 0, %v363
    %v365 = vrot.slane %v359, %v364
    %v366 = vlaneseq
    %v367 = vshrl.u32 %v366, 7
    %v368 = vsub.s32 1, %v367
    %v369 = vrot.slane %v359, %v368
    %v370 = vlaneseq
    %v371 = vshrl.u32 %v370, 7
    %v372 = vsub.s32 2, %v371
    %v373 = vrot.slane %v359, %v372
    %v409 = vunpack.c.l.b16 %v326
    %v410 = vunpack.c.h.b16 %v326
    %v411 = vunpack.c.l.b16 %v327
    %v412 = vunpack.c.l.b16 %v328
    %v413 = vunpack.c.h.b16 %v328
    %v414 = vunpack.c.l.b16 %v329
    %v415 = vunpack.c.l.b16 %v330
    %v416 = vunpack.c.h.b16 %v330
    %v417 = vunpack.c.l.b16 %v331
    %v418 = vunpack.c.l.b16 %v332
    %v419 = vunpack.c.h.b16 %v332
    %v420 = vunpack.c.l.b16 %v333
    %v421 = vunpack.c.l.b16 %v334
    %v422 = vunpack.c.h.b16 %v334
    %v423 = vunpack.c.l.b16 %v335
    %v424 = vunpack.c.l.b16 %v336
    %v425 = vunpack.c.h.b16 %v336
    %v426 = vunpack.c.l.b16 %v337
    %v427 = vunpack.c.l.b16 %v338
    %v428 = vunpack.c.h.b16 %v338
    %v429 = vunpack.c.l.b16 %v339
    %v430 = vunpack.c.l.b16 %v340
    %v431 = vunpack.c.h.b16 %v340
    %v432 = vunpack.c.l.b16 %v341
    %v433 = vunpack.c.l.b16 %v342
    %v434 = vunpack.c.h.b16 %v342
    %v435 = vunpack.c.l.b16 %v343
    %v436 = vunpack.c.l.b16 %v344
    %v437 = vunpack.c.h.b16 %v344
    %v438 = vunpack.c.l.b16 %v345
    %v439 = vunpack.c.l.b16 %v346
    %v440 = vunpack.c.h.b16 %v346
    %v441 = vunpack.c.l.b16 %v347
    %v442 = vunpack.c.l.b16 %v348
    %v443 = vunpack.c.h.b16 %v348
    %v444 = vunpack.c.l.b16 %v349
    %v445 = vunpack.c.l.b16 %v350
    %v446 = vunpack.c.h.b16 %v350
    %v447 = vunpack.c.l.b16 %v351
    %v448 = vunpack.c.l.b16 %v352
    %v449 = vunpack.c.h.b16 %v352
    %v450 = vunpack.c.l.b16 %v353
    %v451 = vunpack.c.l.b16 %v354
    %v452 = vunpack.c.h.b16 %v354
    %v453 = vunpack.c.l.b16 %v355
    %v454 = vunpack.c.l.b16 %v356
    %v455 = vunpack.c.h.b16 %v356
    %v456 = vunpack.c.l.b16 %v357
    %v457 = vpack.c.b16 %v412, %v409
    %v458 = vpack.c.b16 %v413, %v410
    %v459 = vpack.c.b16 %v414, %v411
    %v460 = vpack.c.b16 %v418, %v415
    %v461 = vpack.c.b16 %v419, %v416
    %v462 = vpack.c.b16 %v420, %v417
    %v463 = vpack.c.b16 %v424, %v421
    %v464 = vpack.c.b16 %v425, %v422
    %v465 = vpack.c.b16 %v426, %v423
    %v466 = vpack.c.b16 %v430, %v427
    %v467 = vpack.c.b16 %v431, %v428
    %v468 = vpack.c.b16 %v432, %v429
    %v469 = vpack.c.b16 %v436, %v433
    %v470 = vpack.c.b16 %v437, %v434
    %v471 = vpack.c.b16 %v438, %v435
    %v472 = vpack.c.b16 %v442, %v439
    %v473 = vpack.c.b16 %v443, %v440
    %v474 = vpack.c.b16 %v444, %v441
    %v475 = vpack.c.b16 %v448, %v445
    %v476 = vpack.c.b16 %v449, %v446
    %v477 = vpack.c.b16 %v450, %v447
    %v478 = vpack.c.b16 %v454, %v451
    %v479 = vpack.c.b16 %v455, %v452
    %v480 = vpack.c.b16 %v456, %v453
    %505 = vmatprep.subr.bf16.mxu0 %v479
    %506 = vmatpush1.bf16.msra.mxu0 %v478
    %507 = vmatprep.subr.bf16.mxu0 %v476
    %508 = vmatpush1.bf16.msra.mxu0 %v475
    %509 = vmatprep.subr.bf16.mxu0 %v473
    %510 = vmatpush1.bf16.msra.mxu0 %v472
    %511 = vmatprep.subr.bf16.mxu0 %v470
    %512 = vmatpush1.bf16.msra.mxu0 %v469
    %513 = vmatprep.subr.bf16.mxu0 %v467
    %514 = vmatpush1.bf16.msra.mxu0 %v466
    %515 = vmatprep.subr.bf16.mxu0 %v464
    %516 = vmatpush1.bf16.msra.mxu0 %v463
    %517 = vmatprep.subr.bf16.mxu0 %v461
    %518 = vmatpush1.bf16.msra.mxu0 %v460
    %519 = vmatprep.subr.bf16.mxu0 %v458
    %520 = vmatpush1.bf16.msra.mxu0 %v457
    %521 = vmatprep.subr.bf16.mxu0 0
    %522 = vmatpush2.bf16.msra.mxu0 0
    %523 = vmatprep.subr.bf16.mxu0 0
    %524 = vmatpush2.bf16.msra.mxu0 0
    %525 = vmatprep.subr.bf16.mxu0 0
    %526 = vmatpush2.bf16.msra.mxu0 0
    %527 = vmatprep.subr.bf16.mxu0 0
    %528 = vmatpush2.bf16.msra.mxu0 0
    %529 = vmatprep.subr.bf16.mxu0 0
    %530 = vmatpush2.bf16.msra.mxu0 0
    %531 = vmatprep.subr.bf16.mxu0 0
    %532 = vmatpush2.bf16.msra.mxu0 0
    %533 = vmatprep.subr.bf16.mxu0 0
    %534 = vmatpush2.bf16.msra.mxu0 0
    %535 = vmatprep.subr.bf16.mxu0 0
    %536 = vmatpush2.bf16.msra.mxu0 0
    %537 = vmatprep.mubr.bf16.mxu0 0
    %538 = vmatmul.mubr.bf16.gmra.mxu0 %v360
    %v539 = vpop.f32.mrf.mxu0
    %v540 = vadd.f32 %v365, %v539
    %v541 = vpop.f32.mrf.mxu0
    %v542 = vadd.f32 %v369, %v541
    %v543 = vpop.f32.mrf.mxu0
    %v544 = vpop.f32.mrf.mxu0
    %545 = vdwg.mxu0
    %546 = vmatprep.subr.bf16.mxu0 0
    %547 = vmatpush1.bf16.msra.mxu0 %v480
    %548 = vmatprep.subr.bf16.mxu0 0
    %549 = vmatpush1.bf16.msra.mxu0 %v477
    %550 = vmatprep.subr.bf16.mxu0 0
    %551 = vmatpush1.bf16.msra.mxu0 %v474
    %552 = vmatprep.subr.bf16.mxu0 0
    %553 = vmatpush1.bf16.msra.mxu0 %v471
    %554 = vmatprep.subr.bf16.mxu0 0
    %555 = vmatpush1.bf16.msra.mxu0 %v468
    %556 = vmatprep.subr.bf16.mxu0 0
    %557 = vmatpush1.bf16.msra.mxu0 %v465
    %558 = vmatprep.subr.bf16.mxu0 0
    %559 = vmatpush1.bf16.msra.mxu0 %v462
    %560 = vmatprep.subr.bf16.mxu0 0
    %561 = vmatpush1.bf16.msra.mxu0 %v459
    %562 = vmatprep.subr.bf16.mxu0 0
    %563 = vmatpush2.bf16.msra.mxu0 0
    %564 = vmatprep.subr.bf16.mxu0 0
    %565 = vmatpush2.bf16.msra.mxu0 0
    %566 = vmatprep.subr.bf16.mxu0 0
    %567 = vmatpush2.bf16.msra.mxu0 0
    %568 = vmatprep.subr.bf16.mxu0 0
    %569 = vmatpush2.bf16.msra.mxu0 0
    %570 = vmatprep.subr.bf16.mxu0 0
    %571 = vmatpush2.bf16.msra.mxu0 0
    %572 = vmatprep.subr.bf16.mxu0 0
    %573 = vmatpush2.bf16.msra.mxu0 0
    %574 = vmatprep.subr.bf16.mxu0 0
    %575 = vmatpush2.bf16.msra.mxu0 0
    %576 = vmatprep.subr.bf16.mxu0 0
    %577 = vmatpush2.bf16.msra.mxu0 0
    %578 = vmatprep.mubr.bf16.mxu0 0
    %579 = vmatmul.mubr.bf16.gmra.mxu0 %v360
    %v580 = vpop.f32.mrf.mxu0
    %v581 = vadd.f32 %v373, %v580
    %v582 = vpop.f32.mrf.mxu0
    %v583 = vpop.f32.mrf.mxu0
    %v584 = vpop.f32.mrf.mxu0
    %585 = vdwg.mxu0
    %v586 = vxor.u32 %v540, 2147483648
    %v587 = vmul.f32 %v586, 1.442695
    %v588 = vpow.pop %v587
    %v589 = vadd.f32 %v588, 1.0
    %v590 = vrcp.pop %v589
    %v591 = vmul.f32 1.0, %v590
    %v592 = vmax.f32 %v542, 0.0
    %v593 = vsub.f32 %v592, %v581
    %v594 = vmul.f32 %v591, %v593
    %v595 = vadd.f32 %v581, %v594
    %s596 = scalar_lea.vmem [#allocation5], 384
    %v597 = vld [vmem:[%s596] sm:$0xff]
    %v598 = vld [vmem:[%s596 + $0x8] sm:$0xf]
    %v599 = vld [vmem:[%s596 + $0xc] sm:$0xff]
    %v600 = vld [vmem:[%s596 + $0x14] sm:$0xf]
    %v601 = vld [vmem:[%s596 + $0x18] sm:$0xff]
    %v602 = vld [vmem:[%s596 + $0x20] sm:$0xf]
    %v603 = vld [vmem:[%s596 + $0x24] sm:$0xff]
    %v604 = vld [vmem:[%s596 + $0x2c] sm:$0xf]
    %v605 = vld [vmem:[%s596 + $0x30] sm:$0xff]
    %v606 = vld [vmem:[%s596 + $0x38] sm:$0xf]
    %v607 = vld [vmem:[%s596 + $0x3c] sm:$0xff]
    %v608 = vld [vmem:[%s596 + $0x44] sm:$0xf]
    %v609 = vld [vmem:[%s596 + $0x48] sm:$0xff]
    %v610 = vld [vmem:[%s596 + $0x50] sm:$0xf]
    %v611 = vld [vmem:[%s596 + $0x54] sm:$0xff]
    %v612 = vld [vmem:[%s596 + $0x5c] sm:$0xf]
    %v613 = vld [vmem:[%s596 + $0x60] sm:$0xff]
    %v614 = vld [vmem:[%s596 + $0x68] sm:$0xf]
    %v615 = vld [vmem:[%s596 + $0x6c] sm:$0xff]
    %v616 = vld [vmem:[%s596 + $0x74] sm:$0xf]
    %v617 = vld [vmem:[%s596 + $0x78] sm:$0xff]
    %v618 = vld [vmem:[%s596 + $0x80] sm:$0xf]
    %v619 = vld [vmem:[%s596 + $0x84] sm:$0xff]
    %v620 = vld [vmem:[%s596 + $0x8c] sm:$0xf]
    %v621 = vld [vmem:[%s596 + $0x90] sm:$0xff]
    %v622 = vld [vmem:[%s596 + $0x98] sm:$0xf]
    %v623 = vld [vmem:[%s596 + $0x9c] sm:$0xff]
    %v624 = vld [vmem:[%s596 + $0xa4] sm:$0xf]
    %v625 = vld [vmem:[%s596 + $0xa8] sm:$0xff]
    %v626 = vld [vmem:[%s596 + $0xb0] sm:$0xf]
    %v627 = vld [vmem:[%s596 + $0xb4] sm:$0xff]
    %v628 = vld [vmem:[%s596 + $0xbc] sm:$0xf]
    %s629 = scalar_lea.vmem [#allocation7], 6
    %v630 = vld [vmem:[%s629] sm:$0x7]
    %v631 = vpack.c.bf16 %v595, %v595
    %v633 = vlaneseq
    %v634 = vshrl.u32 %v633, 7
    %v635 = vsub.s32 0, %v634
    %v636 = vrot.slane %v630, %v635
    %v637 = vlaneseq
    %v638 = vshrl.u32 %v637, 7
    %v639 = vsub.s32 1, %v638
    %v640 = vrot.slane %v630, %v639
    %v641 = vlaneseq
    %v642 = vshrl.u32 %v641, 7
    %v643 = vsub.s32 2, %v642
    %v644 = vrot.slane %v630, %v643
    %v680 = vunpack.c.l.b16 %v597
    %v681 = vunpack.c.h.b16 %v597
    %v682 = vunpack.c.l.b16 %v598
    %v683 = vunpack.c.l.b16 %v599
    %v684 = vunpack.c.h.b16 %v599
    %v685 = vunpack.c.l.b16 %v600
    %v686 = vunpack.c.l.b16 %v601
    %v687 = vunpack.c.h.b16 %v601
    %v688 = vunpack.c.l.b16 %v602
    %v689 = vunpack.c.l.b16 %v603
    %v690 = vunpack.c.h.b16 %v603
    %v691 = vunpack.c.l.b16 %v604
    %v692 = vunpack.c.l.b16 %v605
    %v693 = vunpack.c.h.b16 %v605
    %v694 = vunpack.c.l.b16 %v606
    %v695 = vunpack.c.l.b16 %v607
    %v696 = vunpack.c.h.b16 %v607
    %v697 = vunpack.c.l.b16 %v608
    %v698 = vunpack.c.l.b16 %v609
    %v699 = vunpack.c.h.b16 %v609
    %v700 = vunpack.c.l.b16 %v610
    %v701 = vunpack.c.l.b16 %v611
    %v702 = vunpack.c.h.b16 %v611
    %v703 = vunpack.c.l.b16 %v612
    %v704 = vunpack.c.l.b16 %v613
    %v705 = vunpack.c.h.b16 %v613
    %v706 = vunpack.c.l.b16 %v614
    %v707 = vunpack.c.l.b16 %v615
    %v708 = vunpack.c.h.b16 %v615
    %v709 = vunpack.c.l.b16 %v616
    %v710 = vunpack.c.l.b16 %v617
    %v711 = vunpack.c.h.b16 %v617
    %v712 = vunpack.c.l.b16 %v618
    %v713 = vunpack.c.l.b16 %v619
    %v714 = vunpack.c.h.b16 %v619
    %v715 = vunpack.c.l.b16 %v620
    %v716 = vunpack.c.l.b16 %v621
    %v717 = vunpack.c.h.b16 %v621
    %v718 = vunpack.c.l.b16 %v622
    %v719 = vunpack.c.l.b16 %v623
    %v720 = vunpack.c.h.b16 %v623
    %v721 = vunpack.c.l.b16 %v624
    %v722 = vunpack.c.l.b16 %v625
    %v723 = vunpack.c.h.b16 %v625
    %v724 = vunpack.c.l.b16 %v626
    %v725 = vunpack.c.l.b16 %v627
    %v726 = vunpack.c.h.b16 %v627
    %v727 = vunpack.c.l.b16 %v628
    %v728 = vpack.c.b16 %v683, %v680
    %v729 = vpack.c.b16 %v684, %v681
    %v730 = vpack.c.b16 %v685, %v682
    %v731 = vpack.c.b16 %v689, %v686
    %v732 = vpack.c.b16 %v690, %v687
    %v733 = vpack.c.b16 %v691, %v688
    %v734 = vpack.c.b16 %v695, %v692
    %v735 = vpack.c.b16 %v696, %v693
    %v736 = vpack.c.b16 %v697, %v694
    %v737 = vpack.c.b16 %v701, %v698
    %v738 = vpack.c.b16 %v702, %v699
    %v739 = vpack.c.b16 %v703, %v700
    %v740 = vpack.c.b16 %v707, %v704
    %v741 = vpack.c.b16 %v708, %v705
    %v742 = vpack.c.b16 %v709, %v706
    %v743 = vpack.c.b16 %v713, %v710
    %v744 = vpack.c.b16 %v714, %v711
    %v745 = vpack.c.b16 %v715, %v712
    %v746 = vpack.c.b16 %v719, %v716
    %v747 = vpack.c.b16 %v720, %v717
    %v748 = vpack.c.b16 %v721, %v718
    %v749 = vpack.c.b16 %v725, %v722
    %v750 = vpack.c.b16 %v726, %v723
    %v751 = vpack.c.b16 %v727, %v724
    %776 = vmatprep.subr.bf16.mxu0 %v750
    %777 = vmatpush1.bf16.msra.mxu0 %v749
    %778 = vmatprep.subr.bf16.mxu0 %v747
    %779 = vmatpush1.bf16.msra.mxu0 %v746
    %780 = vmatprep.subr.bf16.mxu0 %v744
    %781 = vmatpush1.bf16.msra.mxu0 %v743
    %782 = vmatprep.subr.bf16.mxu0 %v741
    %783 = vmatpush1.bf16.msra.mxu0 %v740
    %784 = vmatprep.subr.bf16.mxu0 %v738
    %785 = vmatpush1.bf16.msra.mxu0 %v737
    %786 = vmatprep.subr.bf16.mxu0 %v735
    %787 = vmatpush1.bf16.msra.mxu0 %v734
    %788 = vmatprep.subr.bf16.mxu0 %v732
    %789 = vmatpush1.bf16.msra.mxu0 %v731
    %790 = vmatprep.subr.bf16.mxu0 %v729
    %791 = vmatpush1.bf16.msra.mxu0 %v728
    %792 = vmatprep.subr.bf16.mxu0 0
    %793 = vmatpush2.bf16.msra.mxu0 0
    %794 = vmatprep.subr.bf16.mxu0 0
    %795 = vmatpush2.bf16.msra.mxu0 0
    %796 = vmatprep.subr.bf16.mxu0 0
    %797 = vmatpush2.bf16.msra.mxu0 0
    %798 = vmatprep.subr.bf16.mxu0 0
    %799 = vmatpush2.bf16.msra.mxu0 0
    %800 = vmatprep.subr.bf16.mxu0 0
    %801 = vmatpush2.bf16.msra.mxu0 0
    %802 = vmatprep.subr.bf16.mxu0 0
    %803 = vmatpush2.bf16.msra.mxu0 0
    %804 = vmatprep.subr.bf16.mxu0 0
    %805 = vmatpush2.bf16.msra.mxu0 0
    %806 = vmatprep.subr.bf16.mxu0 0
    %807 = vmatpush2.bf16.msra.mxu0 0
    %808 = vmatprep.mubr.bf16.mxu0 0
    %809 = vmatmul.mubr.bf16.gmra.mxu0 %v631
    %v810 = vpop.f32.mrf.mxu0
    %v811 = vadd.f32 %v636, %v810
    %v812 = vpop.f32.mrf.mxu0
    %v813 = vadd.f32 %v640, %v812
    %v814 = vpop.f32.mrf.mxu0
    %v815 = vpop.f32.mrf.mxu0
    %816 = vdwg.mxu0
    %817 = vmatprep.subr.bf16.mxu0 0
    %818 = vmatpush1.bf16.msra.mxu0 %v751
    %819 = vmatprep.subr.bf16.mxu0 0
    %820 = vmatpush1.bf16.msra.mxu0 %v748
    %821 = vmatprep.subr.bf16.mxu0 0
    %822 = vmatpush1.bf16.msra.mxu0 %v745
    %823 = vmatprep.subr.bf16.mxu0 0
    %824 = vmatpush1.bf16.msra.mxu0 %v742
    %825 = vmatprep.subr.bf16.mxu0 0
    %826 = vmatpush1.bf16.msra.mxu0 %v739
    %827 = vmatprep.subr.bf16.mxu0 0
    %828 = vmatpush1.bf16.msra.mxu0 %v736
    %829 = vmatprep.subr.bf16.mxu0 0
    %830 = vmatpush1.bf16.msra.mxu0 %v733
    %831 = vmatprep.subr.bf16.mxu0 0
    %832 = vmatpush1.bf16.msra.mxu0 %v730
    %833 = vmatprep.subr.bf16.mxu0 0
    %834 = vmatpush2.bf16.msra.mxu0 0
    %835 = vmatprep.subr.bf16.mxu0 0
    %836 = vmatpush2.bf16.msra.mxu0 0
    %837 = vmatprep.subr.bf16.mxu0 0
    %838 = vmatpush2.bf16.msra.mxu0 0
    %839 = vmatprep.subr.bf16.mxu0 0
    %840 = vmatpush2.bf16.msra.mxu0 0
    %841 = vmatprep.subr.bf16.mxu0 0
    %842 = vmatpush2.bf16.msra.mxu0 0
    %843 = vmatprep.subr.bf16.mxu0 0
    %844 = vmatpush2.bf16.msra.mxu0 0
    %845 = vmatprep.subr.bf16.mxu0 0
    %846 = vmatpush2.bf16.msra.mxu0 0
    %847 = vmatprep.subr.bf16.mxu0 0
    %848 = vmatpush2.bf16.msra.mxu0 0
    %849 = vmatprep.mubr.bf16.mxu0 0
    %850 = vmatmul.mubr.bf16.gmra.mxu0 %v631
    %v851 = vpop.f32.mrf.mxu0
    %v852 = vadd.f32 %v644, %v851
    %v853 = vpop.f32.mrf.mxu0
    %v854 = vpop.f32.mrf.mxu0
    %v855 = vpop.f32.mrf.mxu0
    %856 = vdwg.mxu0
    %v857 = vxor.u32 %v811, 2147483648
    %v858 = vmul.f32 %v857, 1.442695
    %v859 = vpow.pop %v858
    %v860 = vadd.f32 %v859, 1.0
    %v861 = vrcp.pop %v860
    %v862 = vmul.f32 1.0, %v861
    %v863 = vmax.f32 %v813, 0.0
    %v864 = vsub.f32 %v863, %v852
    %v865 = vmul.f32 %v862, %v864
    %v866 = vadd.f32 %v852, %v865
    %867 = vst [vmem:[#allocation8] sm:$0xff] %v866
    // Predicated region
    $region26: #{highway_forward.1} parent=1 // pred_check
      _
    $region27: #{highway_forward.1} parent=1 // pred_check_branch
      %869 = sbr.rel (0) target = $region29
    $region28: #{highway_forward.1} parent=1 // pred_region
      %s871 = ssub.s32 128, 128
      %872 = vsyncadd [#allocation4], %s871
      %s874 = sshll.u32 [#allocation8], 4
      %s875 = int_to_ptr.vmem [resolvable:$true] %s874
      %877 = dma.vmem_to_hbm [thread:$0]  %s875, 128, %s3, [#allocation4]
    $region29: #{highway_forward.1} parent=1 // pred_fallthru
      _
    // Predicated region
    $region30: #{highway_forward.1} parent=1 // pred_check
      _
    $region31: #{highway_forward.1} parent=1 // pred_check_branch
      %879 = sbr.rel (0) target = $region33
    $region32: #{highway_forward.1} parent=1 // pred_region
      %880 = dma.done [#allocation4], 128
    $region33: #{highway_forward.1} parent=1 // pred_fallthru
      _
    %881 = vsyncpa [#allocation3], 1
    %882 = vsyncpa [#allocation6], 1
    %883 = vsyncpa [#allocation4], 1

</llo_original>
